<compile_context>
chip_gen: v7x
topology: tpu7x:2x2x1
jax: 0.10.0
libtpu: 0.0.40
codegen_flags: <defaults>
</compile_context>

<pallas_src>
import math

import jax
import jax.numpy as jnp
import numpy as np
from jax import lax
from jax.experimental import pallas as pl
from jax.experimental.pallas import tpu as pltpu

C_IN = 24 + 4          # 28
C1, C2, C3 = 32, 48, 64
BN_EPS = 1e-5


def _contract_last(a, b):
    """(M, K) x (N, K) -> (M, N), contracting the trailing dims (MXU trans_b form)."""
    return lax.dot_general(
        a, b, (((1,), (1,)), ((), ())), preferred_element_type=jnp.float32)


def _global_pointnet_kernel(
    x_ref,                    # (TB, N, C_IN)
    w1_ref, b1_ref,           # (C1, C_IN), (C1, 1)   BN-folded
    w2_ref, b2_ref,           # (C2, C1),   (C2, 1)
    w3_ref, b3_ref,           # (C3, C2),   (C3, 1)
    wa_ref, ba_ref,           # (1, C3),    (1, 1)
    vec_ref,                  # (TB, C3)  out
    attn_ref,                 # (TB, N)   out (lane-dense)
):
    tb_tile = x_ref.shape[0]

    # Small parameters: load once, reuse across the TB sub-iterations.
    w1, b1 = w1_ref[...], b1_ref[...]
    w2, b2 = w2_ref[...], b2_ref[...]
    w3, b3 = w3_ref[...], b3_ref[...]
    wa, ba = wa_ref[...], ba_ref[...]

    for tb in range(tb_tile):                         # static unroll, TB <= 8
        xb = x_ref[tb]                                # (N, C_IN)

        # 1x1 convs as matmuls in (C_out, N) layout: points live on lanes.
        h = jnp.maximum(_contract_last(w1, xb) + b1, 0.0)                               # (C1, N)
        h = jnp.maximum(jnp.dot(w2, h, preferred_element_type=jnp.float32) + b2, 0.0)   # (C2, N)
        h = jnp.maximum(jnp.dot(w3, h, preferred_element_type=jnp.float32) + b3, 0.0)   # (C3, N)

        # Attention logits + softmax along the lane (point) axis.
        logits = jnp.dot(wa, h, preferred_element_type=jnp.float32) + ba   # (1, N)
        m = jnp.max(logits, axis=1, keepdims=True)                         # (1, 1)
        e = jnp.exp(logits - m)                                            # (1, N)
        s = jnp.sum(e, axis=1, keepdims=True)                              # (1, 1)
        inv = pl.reciprocal(s, approx=True)
        inv = inv * (2.0 - s * inv)        # one Newton step on the scalar: f32-accurate
        attn = e * inv                                                     # (1, N)

        attn_ref[pl.ds(tb, 1), :] = attn

        # Weighted sum over points as a K=N MXU contraction -> (1, C3), lane-major.
        vec_ref[pl.ds(tb, 1), :] = _contract_last(attn, h)


def global_pointnet_forward(x, folded_params, *, batch_tile=8):
    """x: (B, N, C_IN) float32.  Returns (attn_vec (B, C3), attn_weights (B, N, 1))."""
    B, N, c_in = x.shape
    assert c_in == C_IN

    TB = min(batch_tile, B)
    Bp = pl.cdiv(B, TB) * TB
    if Bp != B:
        # Zero-pad the batch; padded rows produce finite garbage that is sliced off.
        x = jnp.concatenate([x, jnp.zeros((Bp - B, N, c_in), x.dtype)], axis=0)

    (w1, b1, w2, b2, w3, b3, wa, ba) = folded_params

    def full_spec(arr):
        nd = arr.ndim
        return pl.BlockSpec(arr.shape, lambda i, _n=nd: (0,) * _n)

    grid_spec = pltpu.PrefetchScalarGridSpec(
        num_scalar_prefetch=0,
        grid=(Bp // TB,),
        in_specs=[
            pl.BlockSpec((TB, N, C_IN), lambda i: (i, 0, 0)),
            full_spec(w1), full_spec(b1),
            full_spec(w2), full_spec(b2),
            full_spec(w3), full_spec(b3),
            full_spec(wa), full_spec(ba),
        ],
        out_specs=[
            pl.BlockSpec((TB, C3), lambda i: (i, 0)),
            pl.BlockSpec((TB, N), lambda i: (i, 0)),
        ],
    )

    macs_per_point = C_IN * C1 + C1 * C2 + C2 * C3 + C3 + C3
    param_elems = (C_IN * C1 + C1) + (C1 * C2 + C2) + (C2 * C3 + C3) + (C3 + 1)
    cost = pl.CostEstimate(
        flops=2 * Bp * N * macs_per_point,
        transcendentals=Bp * N,
        bytes_accessed=4 * (Bp * N * C_IN + Bp * N + Bp * C3 + param_elems),
    )

    attn_vec, attn_flat = pl.pallas_call(
        _global_pointnet_kernel,
        out_shape=(
            jax.ShapeDtypeStruct((Bp, C3), jnp.float32),
            jax.ShapeDtypeStruct((Bp, N), jnp.float32),
        ),
        grid_spec=grid_spec,
        compiler_params=pltpu.CompilerParams(
            dimension_semantics=("parallel",)),
        cost_estimate=cost,
    )(x, w1, b1, w2, b2, w3, b3, wa, ba)

    return attn_vec[:B], attn_flat[:B, :, None]


# ----------------------------------------------------------------------------
# Parameter init (PyTorch-shaped), BN folding, and a pure-JAX reference.
# ----------------------------------------------------------------------------

def init_raw_params(key):
    """Shapes mirror the PyTorch module: Conv1d weight (out, in), BN running stats."""
    kc1, kb1, kc2, kb2, kc3, kb3, ka = jax.random.split(key, 7)

    def conv_init(k, c_in, c_out):
        kw, kb = jax.random.split(k)
        bound = 1.0 / math.sqrt(c_in)
        w = jax.random.uniform(kw, (c_out, c_in), jnp.float32, -bound, bound)
        b = jax.random.uniform(kb, (c_out,), jnp.float32, -bound, bound)
        return w, b

    def bn_init(k, c):
        kg, kb, km, kv = jax.random.split(k, 4)
        gamma = 1.0 + 0.1 * jax.random.normal(kg, (c,), jnp.float32)
        beta = 0.1 * jax.random.normal(kb, (c,), jnp.float32)
        mean = 0.1 * jax.random.normal(km, (c,), jnp.float32)
        var = jax.random.uniform(kv, (c,), jnp.float32, 0.5, 1.5)
        return gamma, beta, mean, var

    w1, b1 = conv_init(kc1, C_IN, C1); bn1 = bn_init(kb1, C1)
    w2, b2 = conv_init(kc2, C1, C2);   bn2 = bn_init(kb2, C2)
    w3, b3 = conv_init(kc3, C2, C3);   bn3 = bn_init(kb3, C3)
    wa, ba = conv_init(ka, C3, 1)      # nn.Linear(64, 1): weight (1, 64), bias (1,)
    return (w1, b1, bn1, w2, b2, bn2, w3, b3, bn3, wa, ba)


def fold_params(raw_params):
    """Fold eval-mode BN into the 1x1 conv weights; biases become (C_out, 1) columns."""
    (w1, b1, bn1, w2, b2, bn2, w3, b3, bn3, wa, ba) = raw_params

    def fold(w, b, bn):
        gamma, beta, mean, var = bn
        scale = gamma / jnp.sqrt(var + BN_EPS)          # (C_out,)
        wf = w * scale[:, None]                         # (C_out, C_in)
        bf = (b - mean) * scale + beta                  # (C_out,)
        return wf, bf[:, None]

    w1f, b1f = fold(w1, b1, bn1)
    w2f, b2f = fold(w2, b2, bn2)
    w3f, b3f = fold(w3, b3, bn3)
    return (w1f, b1f, w2f, b2f, w3f, b3f, wa, ba.reshape(1, 1))


def reference_forward(x, raw_params):
    """Pure-JAX reference mirroring the PyTorch forward (eval-mode BN, unfused)."""
    (w1, b1, bn1, w2, b2, bn2, w3, b3, bn3, wa, ba) = raw_params

    def conv_bn_relu(h, w, b, bn):
        gamma, beta, mean, var = bn
        y = jnp.einsum('bnc,oc->bno', h, w) + b
        y = (y - mean) / jnp.sqrt(var + BN_EPS) * gamma + beta
        return jnp.maximum(y, 0.0)

    h = conv_bn_relu(x, w1, b1, bn1)
    h = conv_bn_relu(h, w2, b2, bn2)
    h = conv_bn_relu(h, w3, b3, bn3)
    logits = jnp.einsum('bnc,oc->bno', h, wa) + ba      # (B, N, 1)
    attn_w = jax.nn.softmax(logits, axis=1)
    attn_vec = jnp.sum(h * attn_w, axis=1)              # (B, C3)
    return attn_vec, attn_w


if __name__ == "__main__":
    key = jax.random.PRNGKey(0)
    k_x, k_p = jax.random.split(key)

    B, N = 2, 8
    x = jax.random.normal(k_x, (B, N, C_IN), jnp.float32)

    raw_params = init_raw_params(k_p)
    folded = fold_params(raw_params)

    attn_vec, attn_weights = global_pointnet_forward(x, folded)
    jax.block_until_ready((attn_vec, attn_weights))

    ref_vec, ref_w = reference_forward(x, raw_params)
    np.testing.assert_allclose(np.asarray(attn_vec), np.asarray(ref_vec),
                               rtol=1e-4, atol=1e-5)
    np.testing.assert_allclose(np.asarray(attn_weights), np.asarray(ref_w),
                               rtol=1e-4, atol=1e-5)

    print("KERNEL_OK")
</pallas_src>

<mosaic_0001>
module attributes {stable_mosaic.version = 11 : i64} {
  func.func @_global_pointnet_kernel(%arg0: i32, %arg1: memref<2x8x28xf32, #tpu.memory_space<vmem>>, %arg2: memref<32x28xf32, #tpu.memory_space<vmem>>, %arg3: memref<32x1xf32, #tpu.memory_space<vmem>>, %arg4: memref<48x32xf32, #tpu.memory_space<vmem>>, %arg5: memref<48x1xf32, #tpu.memory_space<vmem>>, %arg6: memref<64x48xf32, #tpu.memory_space<vmem>>, %arg7: memref<64x1xf32, #tpu.memory_space<vmem>>, %arg8: memref<1x64xf32, #tpu.memory_space<vmem>>, %arg9: memref<1x1xf32, #tpu.memory_space<vmem>>, %arg10: memref<2x64xf32, #tpu.memory_space<vmem>>, %arg11: memref<2x8xf32, #tpu.memory_space<vmem>>) attributes {dimension_semantics = [#tpu.dimension_semantics<parallel>], iteration_bounds = array<i64: 1>, scalar_prefetch = 0 : i64, scratch_operands = 0 : i64, tpu.core_type = #tpu.core_type<tc>, window_params = [{transform_indices = @transform_0, window_bounds = array<i64: 2, 8, 28>}, {pipeline_mode = #tpu.pipeline_mode<synchronous>, transform_indices = @transform_1, window_bounds = array<i64: 32, 28>}, {pipeline_mode = #tpu.pipeline_mode<synchronous>, transform_indices = @transform_2, window_bounds = array<i64: 32, 1>}, {pipeline_mode = #tpu.pipeline_mode<synchronous>, transform_indices = @transform_3, window_bounds = array<i64: 48, 32>}, {pipeline_mode = #tpu.pipeline_mode<synchronous>, transform_indices = @transform_4, window_bounds = array<i64: 48, 1>}, {pipeline_mode = #tpu.pipeline_mode<synchronous>, transform_indices = @transform_5, window_bounds = array<i64: 64, 48>}, {pipeline_mode = #tpu.pipeline_mode<synchronous>, transform_indices = @transform_6, window_bounds = array<i64: 64, 1>}, {pipeline_mode = #tpu.pipeline_mode<synchronous>, transform_indices = @transform_7, window_bounds = array<i64: 1, 64>}, {pipeline_mode = #tpu.pipeline_mode<synchronous>, transform_indices = @transform_8, window_bounds = array<i64: 1, 1>}, {transform_indices = @transform_9, window_bounds = array<i64: 2, 64>}, {transform_indices = @transform_10, window_bounds = array<i64: 2, 8>}]} {
    %c0 = arith.constant 0 : index
    %c0_0 = arith.constant 0 : index
    %0 = vector.load %arg2[%c0, %c0_0] : memref<32x28xf32, #tpu.memory_space<vmem>>, vector<32x28xf32>
    %c0_1 = arith.constant 0 : index
    %c0_2 = arith.constant 0 : index
    %1 = vector.load %arg3[%c0_1, %c0_2] : memref<32x1xf32, #tpu.memory_space<vmem>>, vector<32x1xf32>
    %c0_3 = arith.constant 0 : index
    %c0_4 = arith.constant 0 : index
    %2 = vector.load %arg4[%c0_3, %c0_4] : memref<48x32xf32, #tpu.memory_space<vmem>>, vector<48x32xf32>
    %c0_5 = arith.constant 0 : index
    %c0_6 = arith.constant 0 : index
    %3 = vector.load %arg5[%c0_5, %c0_6] : memref<48x1xf32, #tpu.memory_space<vmem>>, vector<48x1xf32>
    %c0_7 = arith.constant 0 : index
    %c0_8 = arith.constant 0 : index
    %4 = vector.load %arg6[%c0_7, %c0_8] : memref<64x48xf32, #tpu.memory_space<vmem>>, vector<64x48xf32>
    %c0_9 = arith.constant 0 : index
    %c0_10 = arith.constant 0 : index
    %5 = vector.load %arg7[%c0_9, %c0_10] : memref<64x1xf32, #tpu.memory_space<vmem>>, vector<64x1xf32>
    %c0_11 = arith.constant 0 : index
    %c0_12 = arith.constant 0 : index
    %6 = vector.load %arg8[%c0_11, %c0_12] : memref<1x64xf32, #tpu.memory_space<vmem>>, vector<1x64xf32>
    %c0_13 = arith.constant 0 : index
    %c0_14 = arith.constant 0 : index
    %7 = vector.load %arg9[%c0_13, %c0_14] : memref<1x1xf32, #tpu.memory_space<vmem>>, vector<1x1xf32>
    %c0_15 = arith.constant 0 : index
    %c0_16 = arith.constant 0 : index
    %c0_17 = arith.constant 0 : index
    %8 = vector.load %arg1[%c0_15, %c0_16, %c0_17] : memref<2x8x28xf32, #tpu.memory_space<vmem>>, vector<1x8x28xf32>
    %9 = vector.shape_cast %8 : vector<1x8x28xf32> to vector<8x28xf32>
    %cst = arith.constant dense<0.000000e+00> : vector<32x8xf32>
    %10 = tpu.matmul %0, %9, %cst {dimension_numbers = #tpu.dot_dimension_numbers<[1], [1], [0], [0], [0, 0, 1, 0], [], []>} : vector<32x28xf32>, vector<8x28xf32>, vector<32x8xf32> -> vector<32x8xf32>
    %11 = vector.broadcast %1 : vector<32x1xf32> to vector<32x8xf32>
    %12 = arith.addf %10, %11 : vector<32x8xf32>
    %cst_18 = arith.constant 0.000000e+00 : f32
    %13 = vector.broadcast %cst_18 : f32 to vector<32x8xf32>
    %14 = arith.maximumf %12, %13 : vector<32x8xf32>
    %cst_19 = arith.constant dense<0.000000e+00> : vector<48x8xf32>
    %15 = tpu.matmul %2, %14, %cst_19 {dimension_numbers = #tpu.dot_dimension_numbers<[1], [0], [0], [1], [0, 0, 1, 1], [], []>} : vector<48x32xf32>, vector<32x8xf32>, vector<48x8xf32> -> vector<48x8xf32>
    %16 = vector.broadcast %3 : vector<48x1xf32> to vector<48x8xf32>
    %17 = arith.addf %15, %16 : vector<48x8xf32>
    %cst_20 = arith.constant 0.000000e+00 : f32
    %18 = vector.broadcast %cst_20 : f32 to vector<48x8xf32>
    %19 = arith.maximumf %17, %18 : vector<48x8xf32>
    %cst_21 = arith.constant dense<0.000000e+00> : vector<64x8xf32>
    %20 = tpu.matmul %4, %19, %cst_21 {dimension_numbers = #tpu.dot_dimension_numbers<[1], [0], [0], [1], [0, 0, 1, 1], [], []>} : vector<64x48xf32>, vector<48x8xf32>, vector<64x8xf32> -> vector<64x8xf32>
    %21 = vector.broadcast %5 : vector<64x1xf32> to vector<64x8xf32>
    %22 = arith.addf %20, %21 : vector<64x8xf32>
    %cst_22 = arith.constant 0.000000e+00 : f32
    %23 = vector.broadcast %cst_22 : f32 to vector<64x8xf32>
    %24 = arith.maximumf %22, %23 : vector<64x8xf32>
    %cst_23 = arith.constant dense<0.000000e+00> : vector<1x8xf32>
    %25 = tpu.matmul %6, %24, %cst_23 {dimension_numbers = #tpu.dot_dimension_numbers<[1], [0], [0], [1], [0, 0, 1, 1], [], []>} : vector<1x64xf32>, vector<64x8xf32>, vector<1x8xf32> -> vector<1x8xf32>
    %26 = vector.broadcast %7 : vector<1x1xf32> to vector<1x8xf32>
    %27 = arith.addf %25, %26 : vector<1x8xf32>
    %cst_24 = arith.constant dense<0xFF800000> : vector<1xf32>
    %28 = vector.multi_reduction <maximumf>, %27, %cst_24 [1] : vector<1x8xf32> to vector<1xf32>
    %29 = vector.shape_cast %28 : vector<1xf32> to vector<1x1xf32>
    %30 = vector.broadcast %29 : vector<1x1xf32> to vector<1x8xf32>
    %31 = arith.subf %27, %30 : vector<1x8xf32>
    %32 = math.exp %31 : vector<1x8xf32>
    %cst_25 = arith.constant dense<0.000000e+00> : vector<1xf32>
    %33 = vector.multi_reduction <add>, %32, %cst_25 [1] : vector<1x8xf32> to vector<1xf32>
    %34 = vector.shape_cast %33 : vector<1xf32> to vector<1x1xf32>
    %35 = tpu.reciprocal %34 {approx = true} : vector<1x1xf32> -> vector<1x1xf32>
    %36 = arith.mulf %34, %35 : vector<1x1xf32>
    %cst_26 = arith.constant 2.000000e+00 : f32
    %37 = vector.broadcast %cst_26 : f32 to vector<1x1xf32>
    %38 = arith.subf %37, %36 : vector<1x1xf32>
    %39 = arith.mulf %35, %38 : vector<1x1xf32>
    %40 = vector.broadcast %39 : vector<1x1xf32> to vector<1x8xf32>
    %41 = arith.mulf %32, %40 : vector<1x8xf32>
    %c0_27 = arith.constant 0 : index
    %c0_28 = arith.constant 0 : index
    %42 = vector.load %arg11[%c0_27, %c0_28] : memref<2x8xf32, #tpu.memory_space<vmem>>, vector<1x8xf32>
    tpu.vector_store %arg11[%c0_27, %c0_28], %41 {strides = array<i32>} : memref<2x8xf32, #tpu.memory_space<vmem>>, vector<1x8xf32>,
    %cst_29 = arith.constant dense<0.000000e+00> : vector<1x64xf32>
    %43 = tpu.matmul %41, %24, %cst_29 {dimension_numbers = #tpu.dot_dimension_numbers<[1], [1], [0], [0], [0, 0, 1, 0], [], []>} : vector<1x8xf32>, vector<64x8xf32>, vector<1x64xf32> -> vector<1x64xf32>
    %c0_30 = arith.constant 0 : index
    %c0_31 = arith.constant 0 : index
    %44 = vector.load %arg10[%c0_30, %c0_31] : memref<2x64xf32, #tpu.memory_space<vmem>>, vector<1x64xf32>
    tpu.vector_store %arg10[%c0_30, %c0_31], %43 {strides = array<i32>} : memref<2x64xf32, #tpu.memory_space<vmem>>, vector<1x64xf32>,
    %c1 = arith.constant 1 : index
    %c0_32 = arith.constant 0 : index
    %c0_33 = arith.constant 0 : index
    %45 = vector.load %arg1[%c1, %c0_32, %c0_33] : memref<2x8x28xf32, #tpu.memory_space<vmem>>, vector<1x8x28xf32>
    %46 = vector.shape_cast %45 : vector<1x8x28xf32> to vector<8x28xf32>
    %cst_34 = arith.constant dense<0.000000e+00> : vector<32x8xf32>
    %47 = tpu.matmul %0, %46, %cst_34 {dimension_numbers = #tpu.dot_dimension_numbers<[1], [1], [0], [0], [0, 0, 1, 0], [], []>} : vector<32x28xf32>, vector<8x28xf32>, vector<32x8xf32> -> vector<32x8xf32>
    %48 = vector.broadcast %1 : vector<32x1xf32> to vector<32x8xf32>
    %49 = arith.addf %47, %48 : vector<32x8xf32>
    %cst_35 = arith.constant 0.000000e+00 : f32
    %50 = vector.broadcast %cst_35 : f32 to vector<32x8xf32>
    %51 = arith.maximumf %49, %50 : vector<32x8xf32>
    %cst_36 = arith.constant dense<0.000000e+00> : vector<48x8xf32>
    %52 = tpu.matmul %2, %51, %cst_36 {dimension_numbers = #tpu.dot_dimension_numbers<[1], [0], [0], [1], [0, 0, 1, 1], [], []>} : vector<48x32xf32>, vector<32x8xf32>, vector<48x8xf32> -> vector<48x8xf32>
    %53 = vector.broadcast %3 : vector<48x1xf32> to vector<48x8xf32>
    %54 = arith.addf %52, %53 : vector<48x8xf32>
    %cst_37 = arith.constant 0.000000e+00 : f32
    %55 = vector.broadcast %cst_37 : f32 to vector<48x8xf32>
    %56 = arith.maximumf %54, %55 : vector<48x8xf32>
    %cst_38 = arith.constant dense<0.000000e+00> : vector<64x8xf32>
    %57 = tpu.matmul %4, %56, %cst_38 {dimension_numbers = #tpu.dot_dimension_numbers<[1], [0], [0], [1], [0, 0, 1, 1], [], []>} : vector<64x48xf32>, vector<48x8xf32>, vector<64x8xf32> -> vector<64x8xf32>
    %58 = vector.broadcast %5 : vector<64x1xf32> to vector<64x8xf32>
    %59 = arith.addf %57, %58 : vector<64x8xf32>
    %cst_39 = arith.constant 0.000000e+00 : f32
    %60 = vector.broadcast %cst_39 : f32 to vector<64x8xf32>
    %61 = arith.maximumf %59, %60 : vector<64x8xf32>
    %cst_40 = arith.constant dense<0.000000e+00> : vector<1x8xf32>
    %62 = tpu.matmul %6, %61, %cst_40 {dimension_numbers = #tpu.dot_dimension_numbers<[1], [0], [0], [1], [0, 0, 1, 1], [], []>} : vector<1x64xf32>, vector<64x8xf32>, vector<1x8xf32> -> vector<1x8xf32>
    %63 = vector.broadcast %7 : vector<1x1xf32> to vector<1x8xf32>
    %64 = arith.addf %62, %63 : vector<1x8xf32>
    %cst_41 = arith.constant dense<0xFF800000> : vector<1xf32>
    %65 = vector.multi_reduction <maximumf>, %64, %cst_41 [1] : vector<1x8xf32> to vector<1xf32>
    %66 = vector.shape_cast %65 : vector<1xf32> to vector<1x1xf32>
    %67 = vector.broadcast %66 : vector<1x1xf32> to vector<1x8xf32>
    %68 = arith.subf %64, %67 : vector<1x8xf32>
    %69 = math.exp %68 : vector<1x8xf32>
    %cst_42 = arith.constant dense<0.000000e+00> : vector<1xf32>
    %70 = vector.multi_reduction <add>, %69, %cst_42 [1] : vector<1x8xf32> to vector<1xf32>
    %71 = vector.shape_cast %70 : vector<1xf32> to vector<1x1xf32>
    %72 = tpu.reciprocal %71 {approx = true} : vector<1x1xf32> -> vector<1x1xf32>
    %73 = arith.mulf %71, %72 : vector<1x1xf32>
    %cst_43 = arith.constant 2.000000e+00 : f32
    %74 = vector.broadcast %cst_43 : f32 to vector<1x1xf32>
    %75 = arith.subf %74, %73 : vector<1x1xf32>
    %76 = arith.mulf %72, %75 : vector<1x1xf32>
    %77 = vector.broadcast %76 : vector<1x1xf32> to vector<1x8xf32>
    %78 = arith.mulf %69, %77 : vector<1x8xf32>
    %c1_44 = arith.constant 1 : index
    %c0_45 = arith.constant 0 : index
    %79 = vector.load %arg11[%c1_44, %c0_45] : memref<2x8xf32, #tpu.memory_space<vmem>>, vector<1x8xf32>
    tpu.vector_store %arg11[%c1_44, %c0_45], %78 {strides = array<i32>} : memref<2x8xf32, #tpu.memory_space<vmem>>, vector<1x8xf32>,
    %cst_46 = arith.constant dense<0.000000e+00> : vector<1x64xf32>
    %80 = tpu.matmul %78, %61, %cst_46 {dimension_numbers = #tpu.dot_dimension_numbers<[1], [1], [0], [0], [0, 0, 1, 0], [], []>} : vector<1x8xf32>, vector<64x8xf32>, vector<1x64xf32> -> vector<1x64xf32>
    %c1_47 = arith.constant 1 : index
    %c0_48 = arith.constant 0 : index
    %81 = vector.load %arg10[%c1_47, %c0_48] : memref<2x64xf32, #tpu.memory_space<vmem>>, vector<1x64xf32>
    tpu.vector_store %arg10[%c1_47, %c0_48], %80 {strides = array<i32>} : memref<2x64xf32, #tpu.memory_space<vmem>>, vector<1x64xf32>,
    return
  }
  func.func @transform_0(%arg0: i32) -> (i32, i32, i32) {
    %c0_i32 = arith.constant 0 : i32
    %c0_i32_0 = arith.constant 0 : i32
    %c0_i32_1 = arith.constant 0 : i32
    return %arg0, %c0_i32, %c0_i32_0 : i32, i32, i32
  }
  func.func @transform_1(%arg0: i32) -> (i32, i32) {
    %c0_i32 = arith.constant 0 : i32
    %c0_i32_0 = arith.constant 0 : i32
    %c0_i32_1 = arith.constant 0 : i32
    return %c0_i32, %c0_i32_0 : i32, i32
  }
  func.func @transform_2(%arg0: i32) -> (i32, i32) {
    %c0_i32 = arith.constant 0 : i32
    %c0_i32_0 = arith.constant 0 : i32
    %c0_i32_1 = arith.constant 0 : i32
    return %c0_i32, %c0_i32_0 : i32, i32
  }
  func.func @transform_3(%arg0: i32) -> (i32, i32) {
    %c0_i32 = arith.constant 0 : i32
    %c0_i32_0 = arith.constant 0 : i32
    %c0_i32_1 = arith.constant 0 : i32
    return %c0_i32, %c0_i32_0 : i32, i32
  }
  func.func @transform_4(%arg0: i32) -> (i32, i32) {
    %c0_i32 = arith.constant 0 : i32
    %c0_i32_0 = arith.constant 0 : i32
    %c0_i32_1 = arith.constant 0 : i32
    return %c0_i32, %c0_i32_0 : i32, i32
  }
  func.func @transform_5(%arg0: i32) -> (i32, i32) {
    %c0_i32 = arith.constant 0 : i32
    %c0_i32_0 = arith.constant 0 : i32
    %c0_i32_1 = arith.constant 0 : i32
    return %c0_i32, %c0_i32_0 : i32, i32
  }
  func.func @transform_6(%arg0: i32) -> (i32, i32) {
    %c0_i32 = arith.constant 0 : i32
    %c0_i32_0 = arith.constant 0 : i32
    %c0_i32_1 = arith.constant 0 : i32
    return %c0_i32, %c0_i32_0 : i32, i32
  }
  func.func @transform_7(%arg0: i32) -> (i32, i32) {
    %c0_i32 = arith.constant 0 : i32
    %c0_i32_0 = arith.constant 0 : i32
    %c0_i32_1 = arith.constant 0 : i32
    return %c0_i32, %c0_i32_0 : i32, i32
  }
  func.func @transform_8(%arg0: i32) -> (i32, i32) {
    %c0_i32 = arith.constant 0 : i32
    %c0_i32_0 = arith.constant 0 : i32
    %c0_i32_1 = arith.constant 0 : i32
    return %c0_i32, %c0_i32_0 : i32, i32
  }
  func.func @transform_9(%arg0: i32) -> (i32, i32) {
    %c0_i32 = arith.constant 0 : i32
    %c0_i32_0 = arith.constant 0 : i32
    return %arg0, %c0_i32 : i32, i32
  }
  func.func @transform_10(%arg0: i32) -> (i32, i32) {
    %c0_i32 = arith.constant 0 : i32
    %c0_i32_0 = arith.constant 0 : i32
    return %arg0, %c0_i32 : i32, i32
  }
}

</mosaic_0001>

<llo_original>
// kernel: tpu_custom_call.1
$region0: #{tpu_custom_call.1}
  #allocation0 [shape = 'u32[]', space=smem, size = 0x4, offset = 0x4, fixed_abs, tag = 'smem constant byte address 0x4 - core index']
  #allocation1 [shape = 'u32[144,128]{1,0:T(1,128)}', space=vmem, size = 0x12000, scoped, tag = 'internal scratch']
  #allocation2 [shape = 'f32[1,1]{1,0:T(1,128)S(1)}', space=vmem, size = 0x200, scoped, tag = 'scoped memory for tpu_custom_call.1']
  %s0 = inlined_call_operand.vmem [shape: f32[2,8,28], index: 0, kind: input, shape index: {}]
  %s1 = inlined_call_operand.vmem [shape: f32[32,28], index: 1, kind: input, shape index: {}]
  %s2 = inlined_call_operand.vmem [shape: f32[32,1], index: 2, kind: input, shape index: {}]
  %s3 = inlined_call_operand.vmem [shape: f32[48,32], index: 3, kind: input, shape index: {}]
  %s4 = inlined_call_operand.vmem [shape: f32[48,1], index: 4, kind: input, shape index: {}]
  %s5 = inlined_call_operand.vmem [shape: f32[64,48], index: 5, kind: input, shape index: {}]
  %s6 = inlined_call_operand.vmem [shape: f32[64,1], index: 6, kind: input, shape index: {}]
  %s7 = inlined_call_operand.vmem [shape: f32[1,64], index: 7, kind: input, shape index: {}]
  %s8 = inlined_call_operand.<no memory space> [shape: f32[1,1], index: 8, kind: input, shape index: {}]
  %s9 = inlined_call_operand.hbm [shape: f32[2,64], index: 9, kind: output, shape index: {0}]
  %s10 = inlined_call_operand.hbm [shape: f32[2,8], index: 10, kind: output, shape index: {1}]
  %11 = xla_tuple %s9, %s10
  %s12 = sld [smem:[#allocation0]]
  $region54: #{tpu_custom_call.1} parent=0
    _
  %s14 = ssub.s32 1, %s12
  %s15 = scalar_select 0, %s14, %s12
  %v16 = vstv %s8
  %17 = vst [vmem:[#allocation2] sm:$0x1] %v16
  $region1: #{tpu_custom_call.1} parent=0
    #allocation3 [shape = 'u8[1024]{0}', space=vmem, size = 0x400, scoped, tag = 'output window, operand 0, single buffered']
    #allocation4 [shape = 's32[1]{0}', space=sflag, size = 0x4, scoped, tag = 'scoped memory for tpu_custom_call.1']
    #allocation5 [shape = 'u8[1024]{0}', space=vmem, size = 0x400, scoped, tag = 'output window, operand 1, single buffered']
    #allocation6 [shape = 's32[1]{0}', space=sflag, size = 0x4, scoped, tag = 'scoped memory for tpu_custom_call.1']
    %18 = vsyncpa [#allocation4], 0
    %19 = vsyncpa [#allocation6], 0
    // Predicated region
    $region2: #{tpu_custom_call.1} parent=1 // pred_check
      _
    $region3: #{tpu_custom_call.1} parent=1 // pred_check_branch
      %21 = sbr.rel (0) target = $region5
    $region4: #{tpu_custom_call.1} parent=1 // pred_region
      _
    $region5: #{tpu_custom_call.1} parent=1 // pred_fallthru
      _
    // Predicated region
    $region6: #{tpu_custom_call.1} parent=1 // pred_check
      _
    $region7: #{tpu_custom_call.1} parent=1 // pred_check_branch
      %23 = sbr.rel (0) target = $region9
    $region8: #{tpu_custom_call.1} parent=1 // pred_region
      _
    $region9: #{tpu_custom_call.1} parent=1 // pred_fallthru
      _
    // Predicated region
    $region10: #{tpu_custom_call.1} parent=1 // pred_check
      _
    $region11: #{tpu_custom_call.1} parent=1 // pred_check_branch
      %25 = sbr.rel (0) target = $region13
    $region12: #{tpu_custom_call.1} parent=1 // pred_region
      _
    $region13: #{tpu_custom_call.1} parent=1 // pred_fallthru
      _
    // Predicated region
    $region14: #{tpu_custom_call.1} parent=1 // pred_check
      _
    $region15: #{tpu_custom_call.1} parent=1 // pred_check_branch
      %27 = sbr.rel (0) target = $region17
    $region16: #{tpu_custom_call.1} parent=1 // pred_region
      _
    $region17: #{tpu_custom_call.1} parent=1 // pred_fallthru
      _
    // Predicated region
    $region18: #{tpu_custom_call.1} parent=1 // pred_check
      _
    $region19: #{tpu_custom_call.1} parent=1 // pred_check_branch
      %29 = sbr.rel (0) target = $region21
    $region20: #{tpu_custom_call.1} parent=1 // pred_region
      _
    $region21: #{tpu_custom_call.1} parent=1 // pred_fallthru
      _
    // Predicated region
    $region22: #{tpu_custom_call.1} parent=1 // pred_check
      _
    $region23: #{tpu_custom_call.1} parent=1 // pred_check_branch
      %31 = sbr.rel (0) target = $region25
    $region24: #{tpu_custom_call.1} parent=1 // pred_region
      _
    $region25: #{tpu_custom_call.1} parent=1 // pred_fallthru
      _
    // Predicated region
    $region26: #{tpu_custom_call.1} parent=1 // pred_check
      _
    $region27: #{tpu_custom_call.1} parent=1 // pred_check_branch
      %33 = sbr.rel (0) target = $region29
    $region28: #{tpu_custom_call.1} parent=1 // pred_region
      _
    $region29: #{tpu_custom_call.1} parent=1 // pred_fallthru
      _
    // Predicated region
    $region30: #{tpu_custom_call.1} parent=1 // pred_check
      _
    $region31: #{tpu_custom_call.1} parent=1 // pred_check_branch
      %35 = sbr.rel (0) target = $region33
    $region32: #{tpu_custom_call.1} parent=1 // pred_region
      _
    $region33: #{tpu_custom_call.1} parent=1 // pred_fallthru
      _
    // Predicated region
    $region34: #{tpu_custom_call.1} parent=1 // pred_check
      _
    $region35: #{tpu_custom_call.1} parent=1 // pred_check_branch
      %37 = sbr.rel (0) target = $region37
    $region36: #{tpu_custom_call.1} parent=1 // pred_region
      _
    $region37: #{tpu_custom_call.1} parent=1 // pred_fallthru
      _
    %v38 = vld [vmem:[%s1] sm:$0xff]
    %v39 = vld [vmem:[%s1 + $0x8] sm:$0xff]
    %v40 = vld [vmem:[%s1 + $0x10] sm:$0xff]
    %v41 = vld [vmem:[%s1 + $0x18] sm:$0xff]
    %v42 = vld [vmem:[%s2] sm:$0xff]
    %v43 = vld [vmem:[%s2 + $0x8] sm:$0xff]
    %v44 = vld [vmem:[%s2 + $0x10] sm:$0xff]
    %v45 = vld [vmem:[%s2 + $0x18] sm:$0xff]
    %v46 = vld [vmem:[%s3] sm:$0xff]
    %v47 = vld [vmem:[%s3 + $0x8] sm:$0xff]
    %v48 = vld [vmem:[%s3 + $0x10] sm:$0xff]
    %v49 = vld [vmem:[%s3 + $0x18] sm:$0xff]
    %v50 = vld [vmem:[%s3 + $0x20] sm:$0xff]
    %v51 = vld [vmem:[%s3 + $0x28] sm:$0xff]
    %v52 = vld [vmem:[%s4] sm:$0xff]
    %v53 = vld [vmem:[%s4 + $0x8] sm:$0xff]
    %v54 = vld [vmem:[%s4 + $0x10] sm:$0xff]
    %v55 = vld [vmem:[%s4 + $0x18] sm:$0xff]
    %v56 = vld [vmem:[%s4 + $0x20] sm:$0xff]
    %v57 = vld [vmem:[%s4 + $0x28] sm:$0xff]
    %v58 = vld [vmem:[%s5] sm:$0xff]
    %v59 = vld [vmem:[%s5 + $0x8] sm:$0xff]
    %v60 = vld [vmem:[%s5 + $0x10] sm:$0xff]
    %v61 = vld [vmem:[%s5 + $0x18] sm:$0xff]
    %v62 = vld [vmem:[%s5 + $0x20] sm:$0xff]
    %v63 = vld [vmem:[%s5 + $0x28] sm:$0xff]
    %v64 = vld [vmem:[%s5 + $0x30] sm:$0xff]
    %v65 = vld [vmem:[%s5 + $0x38] sm:$0xff]
    %v66 = vld [vmem:[%s6] sm:$0xff]
    %v67 = vld [vmem:[%s6 + $0x8] sm:$0xff]
    %v68 = vld [vmem:[%s6 + $0x10] sm:$0xff]
    %v69 = vld [vmem:[%s6 + $0x18] sm:$0xff]
    %v70 = vld [vmem:[%s6 + $0x20] sm:$0xff]
    %v71 = vld [vmem:[%s6 + $0x28] sm:$0xff]
    %v72 = vld [vmem:[%s6 + $0x30] sm:$0xff]
    %v73 = vld [vmem:[%s6 + $0x38] sm:$0xff]
    %v74 = vld [vmem:[%s7] sm:$0x1]
    %v75 = vld [vmem:[#allocation2] sm:$0x1]
    %v76 = vld [vmem:[%s0] sm:$0xff]
    %78 = vset.pattern.permute.xlu0 0
    %79 = vperm.xlu0 %78, %v42
    %v80 = vpop.permute.xlu0 %79
    %83 = vset.pattern.permute.xlu0 0
    %84 = vperm.xlu0 %83, %v43
    %v85 = vpop.permute.xlu0 %84
    %88 = vset.pattern.permute.xlu0 0
    %89 = vperm.xlu0 %88, %v44
    %v90 = vpop.permute.xlu0 %89
    %93 = vset.pattern.permute.xlu0 0
    %94 = vperm.xlu0 %93, %v45
    %v95 = vpop.permute.xlu0 %94
    %vm97 = vcmask 228352
    %v99 = vsel %vm97, %v38, 0
    %v102 = vsel %vm97, %v39, 0
    %v105 = vsel %vm97, %v40, 0
    %v108 = vsel %vm97, %v41, 0
    %v111 = vsel %vm97, %v76, 0
    %113 = vmatprep.subr.mxu0 0.0
    %114 = vmatpush1.xpose.msra.mxu0 %v111
    %115 = vmatprep.subr.mxu0 0.0
    %116 = vmatpush1.xpose.msra.mxu0 0.0
    %117 = vmatprep.subr.mxu0 0.0
    %118 = vmatpush1.xpose.msra.mxu0 0.0
    %119 = vmatprep.subr.mxu0 0.0
    %120 = vmatpush1.xpose.msra.mxu0 0.0
    %121 = vmatprep.subr.mxu0 0.0
    %122 = vmatpush1.xpose.msra.mxu0 0.0
    %123 = vmatprep.subr.mxu0 0.0
    %124 = vmatpush1.xpose.msra.mxu0 0.0
    %125 = vmatprep.subr.mxu0 0.0
    %126 = vmatpush1.xpose.msra.mxu0 0.0
    %127 = vmatprep.subr.mxu0 0.0
    %128 = vmatpush1.xpose.msra.mxu0 0.0
    %129 = vmatprep.subr.mxu0 0.0
    %130 = vmatpush1.xpose.msra.mxu0 0.0
    %131 = vmatprep.subr.mxu0 0.0
    %132 = vmatpush1.xpose.msra.mxu0 0.0
    %133 = vmatprep.subr.mxu0 0.0
    %134 = vmatpush1.xpose.msra.mxu0 0.0
    %135 = vmatprep.subr.mxu0 0.0
    %136 = vmatpush1.xpose.msra.mxu0 0.0
    %137 = vmatprep.subr.mxu0 0.0
    %138 = vmatpush1.xpose.msra.mxu0 0.0
    %139 = vmatprep.subr.mxu0 0.0
    %140 = vmatpush1.xpose.msra.mxu0 0.0
    %141 = vmatprep.subr.mxu0 0.0
    %142 = vmatpush1.xpose.msra.mxu0 0.0
    %143 = vmatprep.subr.mxu0 0.0
    %144 = vmatpush1.xpose.msra.mxu0 0.0
    %145 = vmatprep.subr.mxu0 0.0
    %146 = vmatpush1.xpose.msra.mxu0 0.0
    %147 = vmatprep.subr.mxu0 0.0
    %148 = vmatpush1.xpose.msra.mxu0 0.0
    %149 = vmatprep.subr.mxu0 0.0
    %150 = vmatpush1.xpose.msra.mxu0 0.0
    %151 = vmatprep.subr.mxu0 0.0
    %152 = vmatpush1.xpose.msra.mxu0 0.0
    %153 = vmatprep.subr.mxu0 0.0
    %154 = vmatpush1.xpose.msra.mxu0 0.0
    %155 = vmatprep.subr.mxu0 0.0
    %156 = vmatpush1.xpose.msra.mxu0 0.0
    %157 = vmatprep.subr.mxu0 0.0
    %158 = vmatpush1.xpose.msra.mxu0 0.0
    %159 = vmatprep.subr.mxu0 0.0
    %160 = vmatpush1.xpose.msra.mxu0 0.0
    %161 = vmatprep.subr.mxu0 0.0
    %162 = vmatpush1.xpose.msra.mxu0 0.0
    %163 = vmatprep.subr.mxu0 0.0
    %164 = vmatpush1.xpose.msra.mxu0 0.0
    %165 = vmatprep.subr.mxu0 0.0
    %166 = vmatpush1.xpose.msra.mxu0 0.0
    %167 = vmatprep.subr.mxu0 0.0
    %168 = vmatpush1.xpose.msra.mxu0 0.0
    %169 = vmatprep.subr.mxu0 0.0
    %170 = vmatpush1.xpose.msra.mxu0 0.0
    %171 = vmatprep.subr.mxu0 0.0
    %172 = vmatpush1.xpose.msra.mxu0 0.0
    %173 = vmatprep.subr.mxu0 0.0
    %174 = vmatpush1.xpose.msra.mxu0 0.0
    %175 = vmatprep.subr.mxu0 0.0
    %176 = vmatpush1.xpose.msra.mxu0 0.0
    %177 = vmatprep.mubr.f32.mxu0 0.0
    %178 = vmatmul.mubr.f32.gmra.mrb[0].mxu0 %v99
    %v179 = vpop.f32.mrb[0].mxu0
    %v180 = vadd.f32 %v80, %v179
    %v181 = vpop.f32.mrb[0].mxu0
    %182 = vmatprep.mubr.f32.mxu0 0.0
    %183 = vmatmul.mubr.f32.gmra.mrb[0].mxu0 %v102
    %v184 = vpop.f32.mrb[0].mxu0
    %v185 = vadd.f32 %v85, %v184
    %v186 = vpop.f32.mrb[0].mxu0
    %187 = vmatprep.mubr.f32.mxu0 0.0
    %188 = vmatmul.mubr.f32.gmra.mrb[0].mxu0 %v105
    %v189 = vpop.f32.mrb[0].mxu0
    %v190 = vadd.f32 %v90, %v189
    %v191 = vpop.f32.mrb[0].mxu0
    %192 = vmatprep.mubr.f32.mxu0 0.0
    %193 = vmatmul.mubr.f32.gmra.mrb[0].mxu0 %v108
    %v194 = vpop.f32.mrb[0].mxu0
    %v195 = vadd.f32 %v95, %v194
    %v196 = vpop.f32.mrb[0].mxu0
    %197 = vdwg.mxu0
    %v198 = vmax.f32 %v180, 0.0
    %v199 = vmax.f32 %v185, 0.0
    %v200 = vmax.f32 %v190, 0.0
    %v201 = vmax.f32 %v195, 0.0
    %203 = vset.pattern.permute.xlu0 0
    %204 = vperm.xlu0 %203, %v52
    %v205 = vpop.permute.xlu0 %204
    %208 = vset.pattern.permute.xlu0 0
    %209 = vperm.xlu0 %208, %v53
    %v210 = vpop.permute.xlu0 %209
    %213 = vset.pattern.permute.xlu0 0
    %214 = vperm.xlu0 %213, %v54
    %v215 = vpop.permute.xlu0 %214
    %218 = vset.pattern.permute.xlu0 0
    %219 = vperm.xlu0 %218, %v55
    %v220 = vpop.permute.xlu0 %219
    %223 = vset.pattern.permute.xlu0 0
    %224 = vperm.xlu0 %223, %v56
    %v225 = vpop.permute.xlu0 %224
    %228 = vset.pattern.permute.xlu0 0
    %229 = vperm.xlu0 %228, %v57
    %v230 = vpop.permute.xlu0 %229
    %vm232 = vcmask 261120
    %v234 = vsel %vm232, %v46, 0
    %v237 = vsel %vm232, %v47, 0
    %v240 = vsel %vm232, %v48, 0
    %v243 = vsel %vm232, %v49, 0
    %v246 = vsel %vm232, %v50, 0
    %v249 = vsel %vm232, %v51, 0
    %251 = vmatprep.subr.mxu0 0.0
    %252 = vmatpush1.msra.mxu0 %v198
    %253 = vmatprep.subr.mxu0 0.0
    %254 = vmatpush1.msra.mxu0 %v199
    %255 = vmatprep.subr.mxu0 0.0
    %256 = vmatpush1.msra.mxu0 %v200
    %257 = vmatprep.subr.mxu0 0.0
    %258 = vmatpush1.msra.mxu0 %v201
    %259 = vmatprep.subr.mxu0 0.0
    %260 = vmatpush1.msra.mxu0 0.0
    %261 = vmatprep.subr.mxu0 0.0
    %262 = vmatpush1.msra.mxu0 0.0
    %263 = vmatprep.subr.mxu0 0.0
    %264 = vmatpush1.msra.mxu0 0.0
    %265 = vmatprep.subr.mxu0 0.0
    %266 = vmatpush1.msra.mxu0 0.0
    %267 = vmatprep.subr.mxu0 0.0
    %268 = vmatpush1.msra.mxu0 0.0
    %269 = vmatprep.subr.mxu0 0.0
    %270 = vmatpush1.msra.mxu0 0.0
    %271 = vmatprep.subr.mxu0 0.0
    %272 = vmatpush1.msra.mxu0 0.0
    %273 = vmatprep.subr.mxu0 0.0
    %274 = vmatpush1.msra.mxu0 0.0
    %275 = vmatprep.subr.mxu0 0.0
    %276 = vmatpush1.msra.mxu0 0.0
    %277 = vmatprep.subr.mxu0 0.0
    %278 = vmatpush1.msra.mxu0 0.0
    %279 = vmatprep.subr.mxu0 0.0
    %280 = vmatpush1.msra.mxu0 0.0
    %281 = vmatprep.subr.mxu0 0.0
    %282 = vmatpush1.msra.mxu0 0.0
    %283 = vmatprep.subr.mxu0 0.0
    %284 = vmatpush1.msra.mxu0 0.0
    %285 = vmatprep.subr.mxu0 0.0
    %286 = vmatpush1.msra.mxu0 0.0
    %287 = vmatprep.subr.mxu0 0.0
    %288 = vmatpush1.msra.mxu0 0.0
    %289 = vmatprep.subr.mxu0 0.0
    %290 = vmatpush1.msra.mxu0 0.0
    %291 = vmatprep.subr.mxu0 0.0
    %292 = vmatpush1.msra.mxu0 0.0
    %293 = vmatprep.subr.mxu0 0.0
    %294 = vmatpush1.msra.mxu0 0.0
    %295 = vmatprep.subr.mxu0 0.0
    %296 = vmatpush1.msra.mxu0 0.0
    %297 = vmatprep.subr.mxu0 0.0
    %298 = vmatpush1.msra.mxu0 0.0
    %299 = vmatprep.subr.mxu0 0.0
    %300 = vmatpush1.msra.mxu0 0.0
    %301 = vmatprep.subr.mxu0 0.0
    %302 = vmatpush1.msra.mxu0 0.0
    %303 = vmatprep.subr.mxu0 0.0
    %304 = vmatpush1.msra.mxu0 0.0
    %305 = vmatprep.subr.mxu0 0.0
    %306 = vmatpush1.msra.mxu0 0.0
    %307 = vmatprep.subr.mxu0 0.0
    %308 = vmatpush1.msra.mxu0 0.0
    %309 = vmatprep.subr.mxu0 0.0
    %310 = vmatpush1.msra.mxu0 0.0
    %311 = vmatprep.subr.mxu0 0.0
    %312 = vmatpush1.msra.mxu0 0.0
    %313 = vmatprep.subr.mxu0 0.0
    %314 = vmatpush1.msra.mxu0 0.0
    %315 = vmatprep.mubr.f32.mxu0 0.0
    %316 = vmatmul.mubr.f32.gmra.mrb[0].mxu0 %v234
    %v317 = vpop.f32.mrb[0].mxu0
    %v318 = vadd.f32 %v205, %v317
    %v319 = vpop.f32.mrb[0].mxu0
    %320 = vmatprep.mubr.f32.mxu0 0.0
    %321 = vmatmul.mubr.f32.gmra.mrb[0].mxu0 %v237
    %v322 = vpop.f32.mrb[0].mxu0
    %v323 = vadd.f32 %v210, %v322
    %v324 = vpop.f32.mrb[0].mxu0
    %325 = vmatprep.mubr.f32.mxu0 0.0
    %326 = vmatmul.mubr.f32.gmra.mrb[0].mxu0 %v240
    %v327 = vpop.f32.mrb[0].mxu0
    %v328 = vadd.f32 %v215, %v327
    %v329 = vpop.f32.mrb[0].mxu0
    %330 = vmatprep.mubr.f32.mxu0 0.0
    %331 = vmatmul.mubr.f32.gmra.mrb[0].mxu0 %v243
    %v332 = vpop.f32.mrb[0].mxu0
    %v333 = vadd.f32 %v220, %v332
    %v334 = vpop.f32.mrb[0].mxu0
    %335 = vmatprep.mubr.f32.mxu0 0.0
    %336 = vmatmul.mubr.f32.gmra.mrb[0].mxu0 %v246
    %v337 = vpop.f32.mrb[0].mxu0
    %v338 = vadd.f32 %v225, %v337
    %v339 = vpop.f32.mrb[0].mxu0
    %340 = vmatprep.mubr.f32.mxu0 0.0
    %341 = vmatmul.mubr.f32.gmra.mrb[0].mxu0 %v249
    %v342 = vpop.f32.mrb[0].mxu0
    %v343 = vadd.f32 %v230, %v342
    %v344 = vpop.f32.mrb[0].mxu0
    %345 = vdwg.mxu0
    %v346 = vmax.f32 %v318, 0.0
    %v347 = vmax.f32 %v323, 0.0
    %v348 = vmax.f32 %v328, 0.0
    %v349 = vmax.f32 %v333, 0.0
    %v350 = vmax.f32 %v338, 0.0
    %v351 = vmax.f32 %v343, 0.0
    %353 = vset.pattern.permute.xlu0 0
    %354 = vperm.xlu0 %353, %v66
    %v355 = vpop.permute.xlu0 %354
    %358 = vset.pattern.permute.xlu0 0
    %359 = vperm.xlu0 %358, %v67
    %v360 = vpop.permute.xlu0 %359
    %363 = vset.pattern.permute.xlu0 0
    %364 = vperm.xlu0 %363, %v68
    %v365 = vpop.permute.xlu0 %364
    %368 = vset.pattern.permute.xlu0 0
    %369 = vperm.xlu0 %368, %v69
    %v370 = vpop.permute.xlu0 %369
    %373 = vset.pattern.permute.xlu0 0
    %374 = vperm.xlu0 %373, %v70
    %v375 = vpop.permute.xlu0 %374
    %378 = vset.pattern.permute.xlu0 0
    %379 = vperm.xlu0 %378, %v71
    %v380 = vpop.permute.xlu0 %379
    %383 = vset.pattern.permute.xlu0 0
    %384 = vperm.xlu0 %383, %v72
    %v385 = vpop.permute.xlu0 %384
    %388 = vset.pattern.permute.xlu0 0
    %389 = vperm.xlu0 %388, %v73
    %v390 = vpop.permute.xlu0 %389
    %vm392 = vcmask 392192
    %v394 = vsel %vm392, %v58, 0
    %v397 = vsel %vm392, %v59, 0
    %v400 = vsel %vm392, %v60, 0
    %v403 = vsel %vm392, %v61, 0
    %v406 = vsel %vm392, %v62, 0
    %v409 = vsel %vm392, %v63, 0
    %v412 = vsel %vm392, %v64, 0
    %v415 = vsel %vm392, %v65, 0
    %417 = vmatprep.subr.mxu0 0.0
    %418 = vmatpush1.msra.mxu0 %v346
    %419 = vmatprep.subr.mxu0 0.0
    %420 = vmatpush1.msra.mxu0 %v347
    %421 = vmatprep.subr.mxu0 0.0
    %422 = vmatpush1.msra.mxu0 %v348
    %423 = vmatprep.subr.mxu0 0.0
    %424 = vmatpush1.msra.mxu0 %v349
    %425 = vmatprep.subr.mxu0 0.0
    %426 = vmatpush1.msra.mxu0 %v350
    %427 = vmatprep.subr.mxu0 0.0
    %428 = vmatpush1.msra.mxu0 %v351
    %429 = vmatprep.subr.mxu0 0.0
    %430 = vmatpush1.msra.mxu0 0.0
    %431 = vmatprep.subr.mxu0 0.0
    %432 = vmatpush1.msra.mxu0 0.0
    %433 = vmatprep.subr.mxu0 0.0
    %434 = vmatpush1.msra.mxu0 0.0
    %435 = vmatprep.subr.mxu0 0.0
    %436 = vmatpush1.msra.mxu0 0.0
    %437 = vmatprep.subr.mxu0 0.0
    %438 = vmatpush1.msra.mxu0 0.0
    %439 = vmatprep.subr.mxu0 0.0
    %440 = vmatpush1.msra.mxu0 0.0
    %441 = vmatprep.subr.mxu0 0.0
    %442 = vmatpush1.msra.mxu0 0.0
    %443 = vmatprep.subr.mxu0 0.0
    %444 = vmatpush1.msra.mxu0 0.0
    %445 = vmatprep.subr.mxu0 0.0
    %446 = vmatpush1.msra.mxu0 0.0
    %447 = vmatprep.subr.mxu0 0.0
    %448 = vmatpush1.msra.mxu0 0.0
    %449 = vmatprep.subr.mxu0 0.0
    %450 = vmatpush1.msra.mxu0 0.0
    %451 = vmatprep.subr.mxu0 0.0
    %452 = vmatpush1.msra.mxu0 0.0
    %453 = vmatprep.subr.mxu0 0.0
    %454 = vmatpush1.msra.mxu0 0.0
    %455 = vmatprep.subr.mxu0 0.0
    %456 = vmatpush1.msra.mxu0 0.0
    %457 = vmatprep.subr.mxu0 0.0
    %458 = vmatpush1.msra.mxu0 0.0
    %459 = vmatprep.subr.mxu0 0.0
    %460 = vmatpush1.msra.mxu0 0.0
    %461 = vmatprep.subr.mxu0 0.0
    %462 = vmatpush1.msra.mxu0 0.0
    %463 = vmatprep.subr.mxu0 0.0
    %464 = vmatpush1.msra.mxu0 0.0
    %465 = vmatprep.subr.mxu0 0.0
    %466 = vmatpush1.msra.mxu0 0.0
    %467 = vmatprep.subr.mxu0 0.0
    %468 = vmatpush1.msra.mxu0 0.0
    %469 = vmatprep.subr.mxu0 0.0
    %470 = vmatpush1.msra.mxu0 0.0
    %471 = vmatprep.subr.mxu0 0.0
    %472 = vmatpush1.msra.mxu0 0.0
    %473 = vmatprep.subr.mxu0 0.0
    %474 = vmatpush1.msra.mxu0 0.0
    %475 = vmatprep.subr.mxu0 0.0
    %476 = vmatpush1.msra.mxu0 0.0
    %477 = vmatprep.subr.mxu0 0.0
    %478 = vmatpush1.msra.mxu0 0.0
    %479 = vmatprep.subr.mxu0 0.0
    %480 = vmatpush1.msra.mxu0 0.0
    %481 = vmatprep.mubr.f32.mxu0 0.0
    %482 = vmatmul.mubr.f32.gmra.mrb[0].mxu0 %v394
    %v483 = vpop.f32.mrb[0].mxu0
    %v484 = vadd.f32 %v355, %v483
    %v485 = vpop.f32.mrb[0].mxu0
    %486 = vmatprep.mubr.f32.mxu0 0.0
    %487 = vmatmul.mubr.f32.gmra.mrb[0].mxu0 %v397
    %v488 = vpop.f32.mrb[0].mxu0
    %v489 = vadd.f32 %v360, %v488
    %v490 = vpop.f32.mrb[0].mxu0
    %491 = vmatprep.mubr.f32.mxu0 0.0
    %492 = vmatmul.mubr.f32.gmra.mrb[0].mxu0 %v400
    %v493 = vpop.f32.mrb[0].mxu0
    %v494 = vadd.f32 %v365, %v493
    %v495 = vpop.f32.mrb[0].mxu0
    %496 = vmatprep.mubr.f32.mxu0 0.0
    %497 = vmatmul.mubr.f32.gmra.mrb[0].mxu0 %v403
    %v498 = vpop.f32.mrb[0].mxu0
    %v499 = vadd.f32 %v370, %v498
    %v500 = vpop.f32.mrb[0].mxu0
    %501 = vmatprep.mubr.f32.mxu0 0.0
    %502 = vmatmul.mubr.f32.gmra.mrb[0].mxu0 %v406
    %v503 = vpop.f32.mrb[0].mxu0
    %v504 = vadd.f32 %v375, %v503
    %v505 = vpop.f32.mrb[0].mxu0
    %506 = vmatprep.mubr.f32.mxu0 0.0
    %507 = vmatmul.mubr.f32.gmra.mrb[0].mxu0 %v409
    %v508 = vpop.f32.mrb[0].mxu0
    %v509 = vadd.f32 %v380, %v508
    %v510 = vpop.f32.mrb[0].mxu0
    %511 = vmatprep.mubr.f32.mxu0 0.0
    %512 = vmatmul.mubr.f32.gmra.mrb[0].mxu0 %v412
    %v513 = vpop.f32.mrb[0].mxu0
    %v514 = vadd.f32 %v385, %v513
    %v515 = vpop.f32.mrb[0].mxu0
    %516 = vmatprep.mubr.f32.mxu0 0.0
    %517 = vmatmul.mubr.f32.gmra.mrb[0].mxu0 %v415
    %v518 = vpop.f32.mrb[0].mxu0
    %v519 = vadd.f32 %v390, %v518
    %v520 = vpop.f32.mrb[0].mxu0
    %521 = vdwg.mxu0
    %v522 = vmax.f32 %v484, 0.0
    %v523 = vmax.f32 %v489, 0.0
    %v524 = vmax.f32 %v494, 0.0
    %v525 = vmax.f32 %v499, 0.0
    %v526 = vmax.f32 %v504, 0.0
    %v527 = vmax.f32 %v509, 0.0
    %v528 = vmax.f32 %v514, 0.0
    %v529 = vmax.f32 %v519, 0.0
    %531 = vset.pattern.permute.xlu0 0
    %532 = vperm.xlu0 %531, %v75
    %v533 = vpop.permute.xlu0 %532
    %v535 = vlaneseq
    %v536 = vshrl.u32 %v535, 7
    %v537 = vsub.s32 0, %v536
    %v538 = vrot.slane %v533, %v537
    %vm539 = vcmask 523264
    %v541 = vsel %vm539, %v74, 0
    %543 = vmatprep.subr.mxu0 0.0
    %544 = vmatpush1.msra.mxu0 %v522
    %545 = vmatprep.subr.mxu0 0.0
    %546 = vmatpush1.msra.mxu0 %v523
    %547 = vmatprep.subr.mxu0 0.0
    %548 = vmatpush1.msra.mxu0 %v524
    %549 = vmatprep.subr.mxu0 0.0
    %550 = vmatpush1.msra.mxu0 %v525
    %551 = vmatprep.subr.mxu0 0.0
    %552 = vmatpush1.msra.mxu0 %v526
    %553 = vmatprep.subr.mxu0 0.0
    %554 = vmatpush1.msra.mxu0 %v527
    %555 = vmatprep.subr.mxu0 0.0
    %556 = vmatpush1.msra.mxu0 %v528
    %557 = vmatprep.subr.mxu0 0.0
    %558 = vmatpush1.msra.mxu0 %v529
    %559 = vmatprep.subr.mxu0 0.0
    %560 = vmatpush1.msra.mxu0 0.0
    %561 = vmatprep.subr.mxu0 0.0
    %562 = vmatpush1.msra.mxu0 0.0
    %563 = vmatprep.subr.mxu0 0.0
    %564 = vmatpush1.msra.mxu0 0.0
    %565 = vmatprep.subr.mxu0 0.0
    %566 = vmatpush1.msra.mxu0 0.0
    %567 = vmatprep.subr.mxu0 0.0
    %568 = vmatpush1.msra.mxu0 0.0
    %569 = vmatprep.subr.mxu0 0.0
    %570 = vmatpush1.msra.mxu0 0.0
    %571 = vmatprep.subr.mxu0 0.0
    %572 = vmatpush1.msra.mxu0 0.0
    %573 = vmatprep.subr.mxu0 0.0
    %574 = vmatpush1.msra.mxu0 0.0
    %575 = vmatprep.subr.mxu0 0.0
    %576 = vmatpush1.msra.mxu0 0.0
    %577 = vmatprep.subr.mxu0 0.0
    %578 = vmatpush1.msra.mxu0 0.0
    %579 = vmatprep.subr.mxu0 0.0
    %580 = vmatpush1.msra.mxu0 0.0
    %581 = vmatprep.subr.mxu0 0.0
    %582 = vmatpush1.msra.mxu0 0.0
    %583 = vmatprep.subr.mxu0 0.0
    %584 = vmatpush1.msra.mxu0 0.0
    %585 = vmatprep.subr.mxu0 0.0
    %586 = vmatpush1.msra.mxu0 0.0
    %587 = vmatprep.subr.mxu0 0.0
    %588 = vmatpush1.msra.mxu0 0.0
    %589 = vmatprep.subr.mxu0 0.0
    %590 = vmatpush1.msra.mxu0 0.0
    %591 = vmatprep.subr.mxu0 0.0
    %592 = vmatpush1.msra.mxu0 0.0
    %593 = vmatprep.subr.mxu0 0.0
    %594 = vmatpush1.msra.mxu0 0.0
    %595 = vmatprep.subr.mxu0 0.0
    %596 = vmatpush1.msra.mxu0 0.0
    %597 = vmatprep.subr.mxu0 0.0
    %598 = vmatpush1.msra.mxu0 0.0
    %599 = vmatprep.subr.mxu0 0.0
    %600 = vmatpush1.msra.mxu0 0.0
    %601 = vmatprep.subr.mxu0 0.0
    %602 = vmatpush1.msra.mxu0 0.0
    %603 = vmatprep.subr.mxu0 0.0
    %604 = vmatpush1.msra.mxu0 0.0
    %605 = vmatprep.subr.mxu0 0.0
    %606 = vmatpush1.msra.mxu0 0.0
    %607 = vmatprep.mubr.f32.mxu0 0.0
    %608 = vmatmul.mubr.f32.gmra.mrb[0].mxu0 %v541
    %v609 = vpop.f32.mrb[0].mxu0
    %v610 = vadd.f32 %v538, %v609
    %v611 = vpop.f32.mrb[0].mxu0
    %612 = vdwg.mxu0
    %vm613 = vcmask 57344
    %v614 = vsel %vm613, %v610, -inf
    %615 = vmax.xlane.f32.xlu0 %v614
    %v616 = vpop.xlane.xlu0 %615
    %v617 = vsub.f32 %v610, %v616
    %v618 = vmul.f32 %v617, 1.442695
    %v619 = vpow.pop %v618
    %v620 = vsel %vm613, %v619, 0.0
    %621 = vadd.xlane.f32.xlu0 %v620
    %v622 = vpop.xlane.xlu0 %621
    %v623 = vrcp.pop %v622
    %v624 = vmul.f32 %v622, %v623
    %v625 = vsub.f32 2.0, %v624
    %v626 = vmul.f32 %v623, %v625
    %v627 = vmul.f32 %v619, %v626
    %628 = vst.msk [vmem:[#allocation5] sm:$0x1] %vm613, %v627
    %vm629 = vcmask 64512
    %v631 = vsel %vm629, %v627, 0
    %v634 = vsel %vm629, %v522, 0
    %v637 = vsel %vm629, %v523, 0
    %v640 = vsel %vm629, %v524, 0
    %v643 = vsel %vm629, %v525, 0
    %v646 = vsel %vm629, %v526, 0
    %v649 = vsel %vm629, %v527, 0
    %v652 = vsel %vm629, %v528, 0
    %v655 = vsel %vm629, %v529, 0
    %657 = vmatprep.subr.mxu0 0.0
    %658 = vmatpush1.xpose.msra.mxu0 %v634
    %659 = vmatprep.subr.mxu0 0.0
    %660 = vmatpush1.xpose.msra.mxu0 %v637
    %661 = vmatprep.subr.mxu0 0.0
    %662 = vmatpush1.xpose.msra.mxu0 %v640
    %663 = vmatprep.subr.mxu0 0.0
    %664 = vmatpush1.xpose.msra.mxu0 %v643
    %665 = vmatprep.subr.mxu0 0.0
    %666 = vmatpush1.xpose.msra.mxu0 %v646
    %667 = vmatprep.subr.mxu0 0.0
    %668 = vmatpush1.xpose.msra.mxu0 %v649
    %669 = vmatprep.subr.mxu0 0.0
    %670 = vmatpush1.xpose.msra.mxu0 %v652
    %671 = vmatprep.subr.mxu0 0.0
    %672 = vmatpush1.xpose.msra.mxu0 %v655
    %673 = vmatprep.subr.mxu0 0.0
    %674 = vmatpush1.xpose.msra.mxu0 0.0
    %675 = vmatprep.subr.mxu0 0.0
    %676 = vmatpush1.xpose.msra.mxu0 0.0
    %677 = vmatprep.subr.mxu0 0.0
    %678 = vmatpush1.xpose.msra.mxu0 0.0
    %679 = vmatprep.subr.mxu0 0.0
    %680 = vmatpush1.xpose.msra.mxu0 0.0
    %681 = vmatprep.subr.mxu0 0.0
    %682 = vmatpush1.xpose.msra.mxu0 0.0
    %683 = vmatprep.subr.mxu0 0.0
    %684 = vmatpush1.xpose.msra.mxu0 0.0
    %685 = vmatprep.subr.mxu0 0.0
    %686 = vmatpush1.xpose.msra.mxu0 0.0
    %687 = vmatprep.subr.mxu0 0.0
    %688 = vmatpush1.xpose.msra.mxu0 0.0
    %689 = vmatprep.subr.mxu0 0.0
    %690 = vmatpush1.xpose.msra.mxu0 0.0
    %691 = vmatprep.subr.mxu0 0.0
    %692 = vmatpush1.xpose.msra.mxu0 0.0
    %693 = vmatprep.subr.mxu0 0.0
    %694 = vmatpush1.xpose.msra.mxu0 0.0
    %695 = vmatprep.subr.mxu0 0.0
    %696 = vmatpush1.xpose.msra.mxu0 0.0
    %697 = vmatprep.subr.mxu0 0.0
    %698 = vmatpush1.xpose.msra.mxu0 0.0
    %699 = vmatprep.subr.mxu0 0.0
    %700 = vmatpush1.xpose.msra.mxu0 0.0
    %701 = vmatprep.subr.mxu0 0.0
    %702 = vmatpush1.xpose.msra.mxu0 0.0
    %703 = vmatprep.subr.mxu0 0.0
    %704 = vmatpush1.xpose.msra.mxu0 0.0
    %705 = vmatprep.subr.mxu0 0.0
    %706 = vmatpush1.xpose.msra.mxu0 0.0
    %707 = vmatprep.subr.mxu0 0.0
    %708 = vmatpush1.xpose.msra.mxu0 0.0
    %709 = vmatprep.subr.mxu0 0.0
    %710 = vmatpush1.xpose.msra.mxu0 0.0
    %711 = vmatprep.subr.mxu0 0.0
    %712 = vmatpush1.xpose.msra.mxu0 0.0
    %713 = vmatprep.subr.mxu0 0.0
    %714 = vmatpush1.xpose.msra.mxu0 0.0
    %715 = vmatprep.subr.mxu0 0.0
    %716 = vmatpush1.xpose.msra.mxu0 0.0
    %717 = vmatprep.subr.mxu0 0.0
    %718 = vmatpush1.xpose.msra.mxu0 0.0
    %719 = vmatprep.subr.mxu0 0.0
    %720 = vmatpush1.xpose.msra.mxu0 0.0
    %721 = vmatprep.mubr.f32.mxu0 0.0
    %722 = vmatmul.mubr.f32.gmra.mrb[0].mxu0 %v631
    %v723 = vpop.f32.mrb[0].mxu0
    %v724 = vadd.f32 0.0, %v723
    %v725 = vpop.f32.mrb[0].mxu0
    %726 = vdwg.mxu0
    %vm727 = vcmask 516096
    %728 = vst.msk [vmem:[#allocation3] sm:$0x1] %vm727, %v724
    %s729 = scalar_lea.vmem %s0, 8
    %v730 = vld [vmem:[%s729] sm:$0xff]
    %v732 = vsel %vm97, %v730, 0
    %734 = vmatprep.subr.mxu0 0.0
    %735 = vmatpush1.xpose.msra.mxu0 %v732
    %736 = vmatprep.subr.mxu0 0.0
    %737 = vmatpush1.xpose.msra.mxu0 0.0
    %738 = vmatprep.subr.mxu0 0.0
    %739 = vmatpush1.xpose.msra.mxu0 0.0
    %740 = vmatprep.subr.mxu0 0.0
    %741 = vmatpush1.xpose.msra.mxu0 0.0
    %742 = vmatprep.subr.mxu0 0.0
    %743 = vmatpush1.xpose.msra.mxu0 0.0
    %744 = vmatprep.subr.mxu0 0.0
    %745 = vmatpush1.xpose.msra.mxu0 0.0
    %746 = vmatprep.subr.mxu0 0.0
    %747 = vmatpush1.xpose.msra.mxu0 0.0
    %748 = vmatprep.subr.mxu0 0.0
    %749 = vmatpush1.xpose.msra.mxu0 0.0
    %750 = vmatprep.subr.mxu0 0.0
    %751 = vmatpush1.xpose.msra.mxu0 0.0
    %752 = vmatprep.subr.mxu0 0.0
    %753 = vmatpush1.xpose.msra.mxu0 0.0
    %754 = vmatprep.subr.mxu0 0.0
    %755 = vmatpush1.xpose.msra.mxu0 0.0
    %756 = vmatprep.subr.mxu0 0.0
    %757 = vmatpush1.xpose.msra.mxu0 0.0
    %758 = vmatprep.subr.mxu0 0.0
    %759 = vmatpush1.xpose.msra.mxu0 0.0
    %760 = vmatprep.subr.mxu0 0.0
    %761 = vmatpush1.xpose.msra.mxu0 0.0
    %762 = vmatprep.subr.mxu0 0.0
    %763 = vmatpush1.xpose.msra.mxu0 0.0
    %764 = vmatprep.subr.mxu0 0.0
    %765 = vmatpush1.xpose.msra.mxu0 0.0
    %766 = vmatprep.subr.mxu0 0.0
    %767 = vmatpush1.xpose.msra.mxu0 0.0
    %768 = vmatprep.subr.mxu0 0.0
    %769 = vmatpush1.xpose.msra.mxu0 0.0
    %770 = vmatprep.subr.mxu0 0.0
    %771 = vmatpush1.xpose.msra.mxu0 0.0
    %772 = vmatprep.subr.mxu0 0.0
    %773 = vmatpush1.xpose.msra.mxu0 0.0
    %774 = vmatprep.subr.mxu0 0.0
    %775 = vmatpush1.xpose.msra.mxu0 0.0
    %776 = vmatprep.subr.mxu0 0.0
    %777 = vmatpush1.xpose.msra.mxu0 0.0
    %778 = vmatprep.subr.mxu0 0.0
    %779 = vmatpush1.xpose.msra.mxu0 0.0
    %780 = vmatprep.subr.mxu0 0.0
    %781 = vmatpush1.xpose.msra.mxu0 0.0
    %782 = vmatprep.subr.mxu0 0.0
    %783 = vmatpush1.xpose.msra.mxu0 0.0
    %784 = vmatprep.subr.mxu0 0.0
    %785 = vmatpush1.xpose.msra.mxu0 0.0
    %786 = vmatprep.subr.mxu0 0.0
    %787 = vmatpush1.xpose.msra.mxu0 0.0
    %788 = vmatprep.subr.mxu0 0.0
    %789 = vmatpush1.xpose.msra.mxu0 0.0
    %790 = vmatprep.subr.mxu0 0.0
    %791 = vmatpush1.xpose.msra.mxu0 0.0
    %792 = vmatprep.subr.mxu0 0.0
    %793 = vmatpush1.xpose.msra.mxu0 0.0
    %794 = vmatprep.subr.mxu0 0.0
    %795 = vmatpush1.xpose.msra.mxu0 0.0
    %796 = vmatprep.subr.mxu0 0.0
    %797 = vmatpush1.xpose.msra.mxu0 0.0
    %798 = vmatprep.mubr.f32.mxu0 0.0
    %799 = vmatmul.mubr.f32.gmra.mrb[0].mxu0 %v99
    %v800 = vpop.f32.mrb[0].mxu0
    %v801 = vadd.f32 %v80, %v800
    %v802 = vpop.f32.mrb[0].mxu0
    %803 = vmatprep.mubr.f32.mxu0 0.0
    %804 = vmatmul.mubr.f32.gmra.mrb[0].mxu0 %v102
    %v805 = vpop.f32.mrb[0].mxu0
    %v806 = vadd.f32 %v85, %v805
    %v807 = vpop.f32.mrb[0].mxu0
    %808 = vmatprep.mubr.f32.mxu0 0.0
    %809 = vmatmul.mubr.f32.gmra.mrb[0].mxu0 %v105
    %v810 = vpop.f32.mrb[0].mxu0
    %v811 = vadd.f32 %v90, %v810
    %v812 = vpop.f32.mrb[0].mxu0
    %813 = vmatprep.mubr.f32.mxu0 0.0
    %814 = vmatmul.mubr.f32.gmra.mrb[0].mxu0 %v108
    %v815 = vpop.f32.mrb[0].mxu0
    %v816 = vadd.f32 %v95, %v815
    %v817 = vpop.f32.mrb[0].mxu0
    %818 = vdwg.mxu0
    %v819 = vmax.f32 %v801, 0.0
    %v820 = vmax.f32 %v806, 0.0
    %v821 = vmax.f32 %v811, 0.0
    %v822 = vmax.f32 %v816, 0.0
    %823 = vmatprep.subr.mxu0 0.0
    %824 = vmatpush1.msra.mxu0 %v819
    %825 = vmatprep.subr.mxu0 0.0
    %826 = vmatpush1.msra.mxu0 %v820
    %827 = vmatprep.subr.mxu0 0.0
    %828 = vmatpush1.msra.mxu0 %v821
    %829 = vmatprep.subr.mxu0 0.0
    %830 = vmatpush1.msra.mxu0 %v822
    %831 = vmatprep.subr.mxu0 0.0
    %832 = vmatpush1.msra.mxu0 0.0
    %833 = vmatprep.subr.mxu0 0.0
    %834 = vmatpush1.msra.mxu0 0.0
    %835 = vmatprep.subr.mxu0 0.0
    %836 = vmatpush1.msra.mxu0 0.0
    %837 = vmatprep.subr.mxu0 0.0
    %838 = vmatpush1.msra.mxu0 0.0
    %839 = vmatprep.subr.mxu0 0.0
    %840 = vmatpush1.msra.mxu0 0.0
    %841 = vmatprep.subr.mxu0 0.0
    %842 = vmatpush1.msra.mxu0 0.0
    %843 = vmatprep.subr.mxu0 0.0
    %844 = vmatpush1.msra.mxu0 0.0
    %845 = vmatprep.subr.mxu0 0.0
    %846 = vmatpush1.msra.mxu0 0.0
    %847 = vmatprep.subr.mxu0 0.0
    %848 = vmatpush1.msra.mxu0 0.0
    %849 = vmatprep.subr.mxu0 0.0
    %850 = vmatpush1.msra.mxu0 0.0
    %851 = vmatprep.subr.mxu0 0.0
    %852 = vmatpush1.msra.mxu0 0.0
    %853 = vmatprep.subr.mxu0 0.0
    %854 = vmatpush1.msra.mxu0 0.0
    %855 = vmatprep.subr.mxu0 0.0
    %856 = vmatpush1.msra.mxu0 0.0
    %857 = vmatprep.subr.mxu0 0.0
    %858 = vmatpush1.msra.mxu0 0.0
    %859 = vmatprep.subr.mxu0 0.0
    %860 = vmatpush1.msra.mxu0 0.0
    %861 = vmatprep.subr.mxu0 0.0
    %862 = vmatpush1.msra.mxu0 0.0
    %863 = vmatprep.subr.mxu0 0.0
    %864 = vmatpush1.msra.mxu0 0.0
    %865 = vmatprep.subr.mxu0 0.0
    %866 = vmatpush1.msra.mxu0 0.0
    %867 = vmatprep.subr.mxu0 0.0
    %868 = vmatpush1.msra.mxu0 0.0
    %869 = vmatprep.subr.mxu0 0.0
    %870 = vmatpush1.msra.mxu0 0.0
    %871 = vmatprep.subr.mxu0 0.0
    %872 = vmatpush1.msra.mxu0 0.0
    %873 = vmatprep.subr.mxu0 0.0
    %874 = vmatpush1.msra.mxu0 0.0
    %875 = vmatprep.subr.mxu0 0.0
    %876 = vmatpush1.msra.mxu0 0.0
    %877 = vmatprep.subr.mxu0 0.0
    %878 = vmatpush1.msra.mxu0 0.0
    %879 = vmatprep.subr.mxu0 0.0
    %880 = vmatpush1.msra.mxu0 0.0
    %881 = vmatprep.subr.mxu0 0.0
    %882 = vmatpush1.msra.mxu0 0.0
    %883 = vmatprep.subr.mxu0 0.0
    %884 = vmatpush1.msra.mxu0 0.0
    %885 = vmatprep.subr.mxu0 0.0
    %886 = vmatpush1.msra.mxu0 0.0
    %887 = vmatprep.mubr.f32.mxu0 0.0
    %888 = vmatmul.mubr.f32.gmra.mrb[0].mxu0 %v234
    %v889 = vpop.f32.mrb[0].mxu0
    %v890 = vadd.f32 %v205, %v889
    %v891 = vpop.f32.mrb[0].mxu0
    %892 = vmatprep.mubr.f32.mxu0 0.0
    %893 = vmatmul.mubr.f32.gmra.mrb[0].mxu0 %v237
    %v894 = vpop.f32.mrb[0].mxu0
    %v895 = vadd.f32 %v210, %v894
    %v896 = vpop.f32.mrb[0].mxu0
    %897 = vmatprep.mubr.f32.mxu0 0.0
    %898 = vmatmul.mubr.f32.gmra.mrb[0].mxu0 %v240
    %v899 = vpop.f32.mrb[0].mxu0
    %v900 = vadd.f32 %v215, %v899
    %v901 = vpop.f32.mrb[0].mxu0
    %902 = vmatprep.mubr.f32.mxu0 0.0
    %903 = vmatmul.mubr.f32.gmra.mrb[0].mxu0 %v243
    %v904 = vpop.f32.mrb[0].mxu0
    %v905 = vadd.f32 %v220, %v904
    %v906 = vpop.f32.mrb[0].mxu0
    %907 = vmatprep.mubr.f32.mxu0 0.0
    %908 = vmatmul.mubr.f32.gmra.mrb[0].mxu0 %v246
    %v909 = vpop.f32.mrb[0].mxu0
    %v910 = vadd.f32 %v225, %v909
    %v911 = vpop.f32.mrb[0].mxu0
    %912 = vmatprep.mubr.f32.mxu0 0.0
    %913 = vmatmul.mubr.f32.gmra.mrb[0].mxu0 %v249
    %v914 = vpop.f32.mrb[0].mxu0
    %v915 = vadd.f32 %v230, %v914
    %v916 = vpop.f32.mrb[0].mxu0
    %917 = vdwg.mxu0
    %v918 = vmax.f32 %v890, 0.0
    %v919 = vmax.f32 %v895, 0.0
    %v920 = vmax.f32 %v900, 0.0
    %v921 = vmax.f32 %v905, 0.0
    %v922 = vmax.f32 %v910, 0.0
    %v923 = vmax.f32 %v915, 0.0
    %924 = vmatprep.subr.mxu0 0.0
    %925 = vmatpush1.msra.mxu0 %v918
    %926 = vmatprep.subr.mxu0 0.0
    %927 = vmatpush1.msra.mxu0 %v919
    %928 = vmatprep.subr.mxu0 0.0
    %929 = vmatpush1.msra.mxu0 %v920
    %930 = vmatprep.subr.mxu0 0.0
    %931 = vmatpush1.msra.mxu0 %v921
    %932 = vmatprep.subr.mxu0 0.0
    %933 = vmatpush1.msra.mxu0 %v922
    %934 = vmatprep.subr.mxu0 0.0
    %935 = vmatpush1.msra.mxu0 %v923
    %936 = vmatprep.subr.mxu0 0.0
    %937 = vmatpush1.msra.mxu0 0.0
    %938 = vmatprep.subr.mxu0 0.0
    %939 = vmatpush1.msra.mxu0 0.0
    %940 = vmatprep.subr.mxu0 0.0
    %941 = vmatpush1.msra.mxu0 0.0
    %942 = vmatprep.subr.mxu0 0.0
    %943 = vmatpush1.msra.mxu0 0.0
    %944 = vmatprep.subr.mxu0 0.0
    %945 = vmatpush1.msra.mxu0 0.0
    %946 = vmatprep.subr.mxu0 0.0
    %947 = vmatpush1.msra.mxu0 0.0
    %948 = vmatprep.subr.mxu0 0.0
    %949 = vmatpush1.msra.mxu0 0.0
    %950 = vmatprep.subr.mxu0 0.0
    %951 = vmatpush1.msra.mxu0 0.0
    %952 = vmatprep.subr.mxu0 0.0
    %953 = vmatpush1.msra.mxu0 0.0
    %954 = vmatprep.subr.mxu0 0.0
    %955 = vmatpush1.msra.mxu0 0.0
    %956 = vmatprep.subr.mxu0 0.0
    %957 = vmatpush1.msra.mxu0 0.0
    %958 = vmatprep.subr.mxu0 0.0
    %959 = vmatpush1.msra.mxu0 0.0
    %960 = vmatprep.subr.mxu0 0.0
    %961 = vmatpush1.msra.mxu0 0.0
    %962 = vmatprep.subr.mxu0 0.0
    %963 = vmatpush1.msra.mxu0 0.0
    %964 = vmatprep.subr.mxu0 0.0
    %965 = vmatpush1.msra.mxu0 0.0
    %966 = vmatprep.subr.mxu0 0.0
    %967 = vmatpush1.msra.mxu0 0.0
    %968 = vmatprep.subr.mxu0 0.0
    %969 = vmatpush1.msra.mxu0 0.0
    %970 = vmatprep.subr.mxu0 0.0
    %971 = vmatpush1.msra.mxu0 0.0
    %972 = vmatprep.subr.mxu0 0.0
    %973 = vmatpush1.msra.mxu0 0.0
    %974 = vmatprep.subr.mxu0 0.0
    %975 = vmatpush1.msra.mxu0 0.0
    %976 = vmatprep.subr.mxu0 0.0
    %977 = vmatpush1.msra.mxu0 0.0
    %978 = vmatprep.subr.mxu0 0.0
    %979 = vmatpush1.msra.mxu0 0.0
    %980 = vmatprep.subr.mxu0 0.0
    %981 = vmatpush1.msra.mxu0 0.0
    %982 = vmatprep.subr.mxu0 0.0
    %983 = vmatpush1.msra.mxu0 0.0
    %984 = vmatprep.subr.mxu0 0.0
    %985 = vmatpush1.msra.mxu0 0.0
    %986 = vmatprep.subr.mxu0 0.0
    %987 = vmatpush1.msra.mxu0 0.0
    %988 = vmatprep.mubr.f32.mxu0 0.0
    %989 = vmatmul.mubr.f32.gmra.mrb[0].mxu0 %v394
    %v990 = vpop.f32.mrb[0].mxu0
    %v991 = vadd.f32 %v355, %v990
    %v992 = vpop.f32.mrb[0].mxu0
    %993 = vmatprep.mubr.f32.mxu0 0.0
    %994 = vmatmul.mubr.f32.gmra.mrb[0].mxu0 %v397
    %v995 = vpop.f32.mrb[0].mxu0
    %v996 = vadd.f32 %v360, %v995
    %v997 = vpop.f32.mrb[0].mxu0
    %998 = vmatprep.mubr.f32.mxu0 0.0
    %999 = vmatmul.mubr.f32.gmra.mrb[0].mxu0 %v400
    %v1000 = vpop.f32.mrb[0].mxu0
    %v1001 = vadd.f32 %v365, %v1000
    %v1002 = vpop.f32.mrb[0].mxu0
    %1003 = vmatprep.mubr.f32.mxu0 0.0
    %1004 = vmatmul.mubr.f32.gmra.mrb[0].mxu0 %v403
    %v1005 = vpop.f32.mrb[0].mxu0
    %v1006 = vadd.f32 %v370, %v1005
    %v1007 = vpop.f32.mrb[0].mxu0
    %1008 = vmatprep.mubr.f32.mxu0 0.0
    %1009 = vmatmul.mubr.f32.gmra.mrb[0].mxu0 %v406
    %v1010 = vpop.f32.mrb[0].mxu0
    %v1011 = vadd.f32 %v375, %v1010
    %v1012 = vpop.f32.mrb[0].mxu0
    %1013 = vmatprep.mubr.f32.mxu0 0.0
    %1014 = vmatmul.mubr.f32.gmra.mrb[0].mxu0 %v409
    %v1015 = vpop.f32.mrb[0].mxu0
    %v1016 = vadd.f32 %v380, %v1015
    %v1017 = vpop.f32.mrb[0].mxu0
    %1018 = vmatprep.mubr.f32.mxu0 0.0
    %1019 = vmatmul.mubr.f32.gmra.mrb[0].mxu0 %v412
    %v1020 = vpop.f32.mrb[0].mxu0
    %v1021 = vadd.f32 %v385, %v1020
    %v1022 = vpop.f32.mrb[0].mxu0
    %1023 = vmatprep.mubr.f32.mxu0 0.0
    %1024 = vmatmul.mubr.f32.gmra.mrb[0].mxu0 %v415
    %v1025 = vpop.f32.mrb[0].mxu0
    %v1026 = vadd.f32 %v390, %v1025
    %v1027 = vpop.f32.mrb[0].mxu0
    %1028 = vdwg.mxu0
    %v1029 = vmax.f32 %v991, 0.0
    %v1030 = vmax.f32 %v996, 0.0
    %v1031 = vmax.f32 %v1001, 0.0
    %v1032 = vmax.f32 %v1006, 0.0
    %v1033 = vmax.f32 %v1011, 0.0
    %v1034 = vmax.f32 %v1016, 0.0
    %v1035 = vmax.f32 %v1021, 0.0
    %v1036 = vmax.f32 %v1026, 0.0
    %1037 = vmatprep.subr.mxu0 0.0
    %1038 = vmatpush1.msra.mxu0 %v1029
    %1039 = vmatprep.subr.mxu0 0.0
    %1040 = vmatpush1.msra.mxu0 %v1030
    %1041 = vmatprep.subr.mxu0 0.0
    %1042 = vmatpush1.msra.mxu0 %v1031
    %1043 = vmatprep.subr.mxu0 0.0
    %1044 = vmatpush1.msra.mxu0 %v1032
    %1045 = vmatprep.subr.mxu0 0.0
    %1046 = vmatpush1.msra.mxu0 %v1033
    %1047 = vmatprep.subr.mxu0 0.0
    %1048 = vmatpush1.msra.mxu0 %v1034
    %1049 = vmatprep.subr.mxu0 0.0
    %1050 = vmatpush1.msra.mxu0 %v1035
    %1051 = vmatprep.subr.mxu0 0.0
    %1052 = vmatpush1.msra.mxu0 %v1036
    %1053 = vmatprep.subr.mxu0 0.0
    %1054 = vmatpush1.msra.mxu0 0.0
    %1055 = vmatprep.subr.mxu0 0.0
    %1056 = vmatpush1.msra.mxu0 0.0
    %1057 = vmatprep.subr.mxu0 0.0
    %1058 = vmatpush1.msra.mxu0 0.0
    %1059 = vmatprep.subr.mxu0 0.0
    %1060 = vmatpush1.msra.mxu0 0.0
    %1061 = vmatprep.subr.mxu0 0.0
    %1062 = vmatpush1.msra.mxu0 0.0
    %1063 = vmatprep.subr.mxu0 0.0
    %1064 = vmatpush1.msra.mxu0 0.0
    %1065 = vmatprep.subr.mxu0 0.0
    %1066 = vmatpush1.msra.mxu0 0.0
    %1067 = vmatprep.subr.mxu0 0.0
    %1068 = vmatpush1.msra.mxu0 0.0
    %1069 = vmatprep.subr.mxu0 0.0
    %1070 = vmatpush1.msra.mxu0 0.0
    %1071 = vmatprep.subr.mxu0 0.0
    %1072 = vmatpush1.msra.mxu0 0.0
    %1073 = vmatprep.subr.mxu0 0.0
    %1074 = vmatpush1.msra.mxu0 0.0
    %1075 = vmatprep.subr.mxu0 0.0
    %1076 = vmatpush1.msra.mxu0 0.0
    %1077 = vmatprep.subr.mxu0 0.0
    %1078 = vmatpush1.msra.mxu0 0.0
    %1079 = vmatprep.subr.mxu0 0.0
    %1080 = vmatpush1.msra.mxu0 0.0
    %1081 = vmatprep.subr.mxu0 0.0
    %1082 = vmatpush1.msra.mxu0 0.0
    %1083 = vmatprep.subr.mxu0 0.0
    %1084 = vmatpush1.msra.mxu0 0.0
    %1085 = vmatprep.subr.mxu0 0.0
    %1086 = vmatpush1.msra.mxu0 0.0
    %1087 = vmatprep.subr.mxu0 0.0
    %1088 = vmatpush1.msra.mxu0 0.0
    %1089 = vmatprep.subr.mxu0 0.0
    %1090 = vmatpush1.msra.mxu0 0.0
    %1091 = vmatprep.subr.mxu0 0.0
    %1092 = vmatpush1.msra.mxu0 0.0
    %1093 = vmatprep.subr.mxu0 0.0
    %1094 = vmatpush1.msra.mxu0 0.0
    %1095 = vmatprep.subr.mxu0 0.0
    %1096 = vmatpush1.msra.mxu0 0.0
    %1097 = vmatprep.subr.mxu0 0.0
    %1098 = vmatpush1.msra.mxu0 0.0
    %1099 = vmatprep.subr.mxu0 0.0
    %1100 = vmatpush1.msra.mxu0 0.0
    %1101 = vmatprep.mubr.f32.mxu0 0.0
    %1102 = vmatmul.mubr.f32.gmra.mrb[0].mxu0 %v541
    %v1103 = vpop.f32.mrb[0].mxu0
    %v1104 = vadd.f32 %v538, %v1103
    %v1105 = vpop.f32.mrb[0].mxu0
    %1106 = vdwg.mxu0
    %v1107 = vsel %vm613, %v1104, -inf
    %1108 = vmax.xlane.f32.xlu0 %v1107
    %v1109 = vpop.xlane.xlu0 %1108
    %v1110 = vsub.f32 %v1104, %v1109
    %v1111 = vmul.f32 %v1110, 1.442695
    %v1112 = vpow.pop %v1111
    %v1113 = vsel %vm613, %v1112, 0.0
    %1114 = vadd.xlane.f32.xlu0 %v1113
    %v1115 = vpop.xlane.xlu0 %1114
    %v1116 = vrcp.pop %v1115
    %v1117 = vmul.f32 %v1115, %v1116
    %v1118 = vsub.f32 2.0, %v1117
    %v1119 = vmul.f32 %v1116, %v1118
    %v1120 = vmul.f32 %v1112, %v1119
    %1121 = vst.msk [vmem:[#allocation5 + $0x1] sm:$0x1] %vm613, %v1120
    %v1123 = vsel %vm629, %v1120, 0
    %v1126 = vsel %vm629, %v1029, 0
    %v1129 = vsel %vm629, %v1030, 0
    %v1132 = vsel %vm629, %v1031, 0
    %v1135 = vsel %vm629, %v1032, 0
    %v1138 = vsel %vm629, %v1033, 0
    %v1141 = vsel %vm629, %v1034, 0
    %v1144 = vsel %vm629, %v1035, 0
    %v1147 = vsel %vm629, %v1036, 0
    %1149 = vmatprep.subr.mxu0 0.0
    %1150 = vmatpush1.xpose.msra.mxu0 %v1126
    %1151 = vmatprep.subr.mxu0 0.0
    %1152 = vmatpush1.xpose.msra.mxu0 %v1129
    %1153 = vmatprep.subr.mxu0 0.0
    %1154 = vmatpush1.xpose.msra.mxu0 %v1132
    %1155 = vmatprep.subr.mxu0 0.0
    %1156 = vmatpush1.xpose.msra.mxu0 %v1135
    %1157 = vmatprep.subr.mxu0 0.0
    %1158 = vmatpush1.xpose.msra.mxu0 %v1138
    %1159 = vmatprep.subr.mxu0 0.0
    %1160 = vmatpush1.xpose.msra.mxu0 %v1141
    %1161 = vmatprep.subr.mxu0 0.0
    %1162 = vmatpush1.xpose.msra.mxu0 %v1144
    %1163 = vmatprep.subr.mxu0 0.0
    %1164 = vmatpush1.xpose.msra.mxu0 %v1147
    %1165 = vmatprep.subr.mxu0 0.0
    %1166 = vmatpush1.xpose.msra.mxu0 0.0
    %1167 = vmatprep.subr.mxu0 0.0
    %1168 = vmatpush1.xpose.msra.mxu0 0.0
    %1169 = vmatprep.subr.mxu0 0.0
    %1170 = vmatpush1.xpose.msra.mxu0 0.0
    %1171 = vmatprep.subr.mxu0 0.0
    %1172 = vmatpush1.xpose.msra.mxu0 0.0
    %1173 = vmatprep.subr.mxu0 0.0
    %1174 = vmatpush1.xpose.msra.mxu0 0.0
    %1175 = vmatprep.subr.mxu0 0.0
    %1176 = vmatpush1.xpose.msra.mxu0 0.0
    %1177 = vmatprep.subr.mxu0 0.0
    %1178 = vmatpush1.xpose.msra.mxu0 0.0
    %1179 = vmatprep.subr.mxu0 0.0
    %1180 = vmatpush1.xpose.msra.mxu0 0.0
    %1181 = vmatprep.subr.mxu0 0.0
    %1182 = vmatpush1.xpose.msra.mxu0 0.0
    %1183 = vmatprep.subr.mxu0 0.0
    %1184 = vmatpush1.xpose.msra.mxu0 0.0
    %1185 = vmatprep.subr.mxu0 0.0
    %1186 = vmatpush1.xpose.msra.mxu0 0.0
    %1187 = vmatprep.subr.mxu0 0.0
    %1188 = vmatpush1.xpose.msra.mxu0 0.0
    %1189 = vmatprep.subr.mxu0 0.0
    %1190 = vmatpush1.xpose.msra.mxu0 0.0
    %1191 = vmatprep.subr.mxu0 0.0
    %1192 = vmatpush1.xpose.msra.mxu0 0.0
    %1193 = vmatprep.subr.mxu0 0.0
    %1194 = vmatpush1.xpose.msra.mxu0 0.0
    %1195 = vmatprep.subr.mxu0 0.0
    %1196 = vmatpush1.xpose.msra.mxu0 0.0
    %1197 = vmatprep.subr.mxu0 0.0
    %1198 = vmatpush1.xpose.msra.mxu0 0.0
    %1199 = vmatprep.subr.mxu0 0.0
    %1200 = vmatpush1.xpose.msra.mxu0 0.0
    %1201 = vmatprep.subr.mxu0 0.0
    %1202 = vmatpush1.xpose.msra.mxu0 0.0
    %1203 = vmatprep.subr.mxu0 0.0
    %1204 = vmatpush1.xpose.msra.mxu0 0.0
    %1205 = vmatprep.subr.mxu0 0.0
    %1206 = vmatpush1.xpose.msra.mxu0 0.0
    %1207 = vmatprep.subr.mxu0 0.0
    %1208 = vmatpush1.xpose.msra.mxu0 0.0
    %1209 = vmatprep.subr.mxu0 0.0
    %1210 = vmatpush1.xpose.msra.mxu0 0.0
    %1211 = vmatprep.subr.mxu0 0.0
    %1212 = vmatpush1.xpose.msra.mxu0 0.0
    %1213 = vmatprep.mubr.f32.mxu0 0.0
    %1214 = vmatmul.mubr.f32.gmra.mrb[0].mxu0 %v1123
    %v1215 = vpop.f32.mrb[0].mxu0
    %v1216 = vadd.f32 0.0, %v1215
    %v1217 = vpop.f32.mrb[0].mxu0
    %1218 = vdwg.mxu0
    %1219 = vst.msk [vmem:[#allocation3 + $0x1] sm:$0x1] %vm727, %v1216
    // Predicated region
    $region38: #{tpu_custom_call.1} parent=1 // pred_check
      _
    $region39: #{tpu_custom_call.1} parent=1 // pred_check_branch
      %1221 = sbr.rel (0) target = $region41
    $region40: #{tpu_custom_call.1} parent=1 // pred_region
      %s1223 = ssub.s32 32, 32
      %1224 = vsyncadd [#allocation4], %s1223
      %s1226 = sshll.u32 [#allocation3], 4
      %s1227 = int_to_ptr.vmem [resolvable:$true] %s1226
      %1229 = dma.vmem_to_hbm [thread:$0]  %s1227, 32, %s9, [#allocation4]
    $region41: #{tpu_custom_call.1} parent=1 // pred_fallthru
      _
    // Predicated region
    $region42: #{tpu_custom_call.1} parent=1 // pred_check
      _
    $region43: #{tpu_custom_call.1} parent=1 // pred_check_branch
      %1231 = sbr.rel (0) target = $region45
    $region44: #{tpu_custom_call.1} parent=1 // pred_region
      %s1233 = ssub.s32 32, 32
      %1234 = vsyncadd [#allocation6], %s1233
      %s1236 = sshll.u32 [#allocation5], 4
      %s1237 = int_to_ptr.vmem [resolvable:$true] %s1236
      %1239 = dma.vmem_to_hbm [thread:$0]  %s1237, 32, %s10, [#allocation6]
    $region45: #{tpu_custom_call.1} parent=1 // pred_fallthru
      _
    // Predicated region
    $region46: #{tpu_custom_call.1} parent=1 // pred_check
      _
    $region47: #{tpu_custom_call.1} parent=1 // pred_check_branch
      %1241 = sbr.rel (0) target = $region49
    $region48: #{tpu_custom_call.1} parent=1 // pred_region
      %1242 = dma.done [#allocation4], 32
    $region49: #{tpu_custom_call.1} parent=1 // pred_fallthru
      _
    // Predicated region
    $region50: #{tpu_custom_call.1} parent=1 // pred_check
      _
    $region51: #{tpu_custom_call.1} parent=1 // pred_check_branch
      %1244 = sbr.rel (0) target = $region53
    $region52: #{tpu_custom_call.1} parent=1 // pred_region
      %1245 = dma.done [#allocation6], 32
    $region53: #{tpu_custom_call.1} parent=1 // pred_fallthru
      _
    %1246 = vsyncpa [#allocation4], 1
    %1247 = vsyncpa [#allocation6], 1

</llo_original>
